<compile_context>
chip_gen: v7x
topology: tpu7x:2x2x1
jax: 0.10.0
libtpu: 0.0.40
codegen_flags: <defaults>
</compile_context>

<pallas_src>
import functools

import numpy as np

import jax
import jax.numpy as jnp
from jax.experimental import pallas as pl
from jax.experimental.pallas import tpu as pltpu


# ------------------ numpy transcription of the PyTorch spec -----------------
# Used only on the host: (a) to build the permutation matrices from an index
# map, (b) as the correctness reference in __main__.

def _np_squeeze1d(x, f):
    B, C, H = x.shape
    x = x.reshape(B, C, H // f, f)
    x = np.transpose(x, (0, 1, 3, 2))
    return x.reshape(B, C * f, H // f)


def _np_squeeze2d(x, f):
    B, C, H, W = x.shape
    x = x.reshape(B, C, H // f, f, W // f, f)
    x = np.transpose(x, (0, 1, 3, 5, 2, 4))
    return x.reshape(B, C * f * f, H // f, W // f)


def _np_squeeze3d(x, f):
    B, C, D, H, W = x.shape
    x = x.reshape(B, C, D // f, f, H // f, f, W // f, f)
    x = np.transpose(x, (0, 1, 3, 5, 7, 2, 4, 6))
    return x.reshape(B, C * f ** 3, D // f, H // f, W // f)


def _np_unsqueeze1d(x, f):
    B, C, H = x.shape
    x = x.reshape(B, C // f, f, H)
    x = np.transpose(x, (0, 1, 3, 2))
    return x.reshape(B, C // f, H * f)


def _np_unsqueeze2d(x, f):
    B, C, H, W = x.shape
    f2 = f * f
    x = x.reshape(B, C // f2, f, f, H, W)
    x = np.transpose(x, (0, 1, 4, 2, 5, 3))
    return x.reshape(B, C // f2, H * f, W * f)


def _np_unsqueeze3d(x, f):
    B, C, D, H, W = x.shape
    f3 = f ** 3
    x = x.reshape(B, C // f3, f, f, f, D, H, W)
    x = np.transpose(x, (0, 1, 5, 2, 6, 3, 7, 4))
    return x.reshape(B, C // f3, D * f, H * f, W * f)


_NP_FWD = {"1D": _np_squeeze1d, "2D": _np_squeeze2d, "3D": _np_squeeze3d}
_NP_REV = {"1D": _np_unsqueeze1d, "2D": _np_unsqueeze2d, "3D": _np_unsqueeze3d}


# --------------------- host-side permutation-matrix builder -----------------

@functools.lru_cache(maxsize=None)
def _build_perm_matrices(per_batch_shape, factor, dim, reverse):
    """Builds (out_shape, A, B) with out2d = sum_j A[j] @ in2d @ B[j].

    in2d  is the per-batch input flattened to (R_in, N_in)   [N_in = last axis]
    out2d is the per-batch output flattened to (R_out, N_out) [N_out = last axis]
    A: (factor, R_out, R_in) 0/1, row-space permutation per factor offset.
    B: (factor, N_in, N_out) 0/1, lane-space de-interleave / interleave.
    """
    f = int(factor)
    idx = np.arange(int(np.prod(per_batch_shape)), dtype=np.int64)
    idx = idx.reshape((1,) + tuple(per_batch_shape))
    ref_fn = (_NP_REV if reverse else _NP_FWD)[dim]
    src = ref_fn(idx, f)[0]                  # per-batch output of flat src indices
    out_shape = tuple(src.shape)

    n_in = per_batch_shape[-1]
    n_out = out_shape[-1]
    r_in = idx.size // n_in
    r_out = src.size // n_out

    src2 = src.reshape(r_out, n_out)
    src_row = src2 // n_in
    src_col = src2 % n_in
    rr = np.broadcast_to(np.arange(r_out)[:, None], src2.shape)
    cc = np.broadcast_to(np.arange(n_out)[None, :], src2.shape)
    # The factor digit that crosses between the row space and the lane space:
    #   squeeze:   low digit of the source column;  unsqueeze: low digit of the
    #   output column.  Within a fixed digit, the row map depends only on the
    #   output row and the column map only on the output column.
    j = (cc % f) if reverse else (src_col % f)

    A = np.zeros((f, r_out, r_in), np.float32)
    B = np.zeros((f, n_in, n_out), np.float32)
    A[j.ravel(), rr.ravel(), src_row.ravel()] = 1.0
    B[j.ravel(), src_col.ravel(), cc.ravel()] = 1.0
    return out_shape, A, B


# ------------------------------ Pallas kernel -------------------------------

def _perm_matmul_kernel(x_ref, a_ref, b_ref, o_ref, *, factor):
    """out = sum_j A_j @ x @ B_j for one batch element (pure data movement on MXU).

    x_ref: (1, R_in, N_in)        flattened per-batch input
    a_ref: (factor, R_out, R_in)  0/1 row-space permutation
    b_ref: (factor, N_in, N_out)  0/1 lane de/interleave
    o_ref: (1, R_out, N_out)
    """
    x = x_ref[0]
    acc = None
    for j in range(factor):                      # static unroll (factor is 2 or 4)
        y = jnp.dot(x, b_ref[j], preferred_element_type=jnp.float32)
        t = jnp.dot(a_ref[j], y, preferred_element_type=jnp.float32)
        acc = t if acc is None else acc + t
    o_ref[0] = acc.astype(o_ref.dtype)


def _apply_permutation(x2d, A, B):
    """x2d: (batch, R_in, N_in) -> (batch, R_out, N_out) in one pallas_call."""
    nb, r_in, n_in = x2d.shape
    f, r_out, _ = A.shape
    n_out = B.shape[-1]
    kern = functools.partial(_perm_matmul_kernel, factor=f)
    return pl.pallas_call(
        kern,
        out_shape=jax.ShapeDtypeStruct((nb, r_out, n_out), x2d.dtype),
        grid=(nb,),
        in_specs=[
            pl.BlockSpec((1, r_in, n_in), lambda b: (b, 0, 0)),
            pl.BlockSpec((f, r_out, r_in), lambda b: (0, 0, 0)),
            pl.BlockSpec((f, n_in, n_out), lambda b: (0, 0, 0)),
        ],
        out_specs=pl.BlockSpec((1, r_out, n_out), lambda b: (b, 0, 0)),
        compiler_params=pltpu.CompilerParams(dimension_semantics=("parallel",)),
    )(x2d, A, B)


# ------------------------------ module wrapper ------------------------------

def squeeze_layer_forward(x, logdet=None, *, factor, dim="3D", reverse=False):
    """Pallas TPU equivalent of SqueezeLayer(factor, dim).forward(x, logdet, reverse).

    Returns (output, logdet); logdet is a pure pass-through, exactly as in the
    PyTorch module.
    """
    assert isinstance(factor, int) and factor >= 1
    if factor == 1:
        return x, logdet

    per_batch = tuple(int(s) for s in x.shape[1:])
    out_pb_shape, A, B = _build_perm_matrices(per_batch, factor, dim, bool(reverse))

    nb = x.shape[0]
    n_in = per_batch[-1]
    r_in = int(np.prod(per_batch)) // n_in
    x2d = x.reshape(nb, r_in, n_in)              # free row-major metadata reshape
    out2d = _apply_permutation(x2d, jnp.asarray(A), jnp.asarray(B))
    out = out2d.reshape((nb,) + out_pb_shape)    # free row-major metadata reshape
    return out, logdet


# ----------------------------------- demo -----------------------------------

if __name__ == "__main__":
    key = jax.random.PRNGKey(0)
    k1, k2, k3 = jax.random.split(key, 3)

    cases = [
        # (dim, factor, input shape, key)  -- '3D' is the module's default dim
        ("3D", 2, (2, 2, 4, 4, 16), k1),
        ("2D", 2, (2, 2, 8, 16), k2),
        ("1D", 4, (2, 3, 32), k3),
    ]

    for dim, factor, shape, k in cases:
        x = jax.random.normal(k, shape, jnp.float32)
        fwd = jax.jit(functools.partial(squeeze_layer_forward,
                                        factor=factor, dim=dim, reverse=False))
        rev = jax.jit(functools.partial(squeeze_layer_forward,
                                        factor=factor, dim=dim, reverse=True))

        y, _ = fwd(x)
        y = jax.block_until_ready(y)
        y_ref = _NP_FWD[dim](np.asarray(x), factor)
        assert y.shape == y_ref.shape, (dim, y.shape, y_ref.shape)
        assert np.allclose(np.asarray(y), y_ref, rtol=0.0, atol=1e-6), dim

        # reverse path (unsqueeze) must invert the forward path exactly
        x_rt, _ = rev(y)
        x_rt = jax.block_until_ready(x_rt)
        assert x_rt.shape == x.shape, (dim, x_rt.shape, x.shape)
        assert np.allclose(np.asarray(x_rt), np.asarray(x), rtol=0.0, atol=1e-6), dim

    print("KERNEL_OK")
</pallas_src>

<mosaic_0001>
module attributes {stable_mosaic.version = 11 : i64} {
  func.func @_perm_matmul_kernel(%arg0: i32, %arg1: memref<1x32x16xf32, #tpu.memory_space<vmem>>, %arg2: memref<2x64x32xf32, #tpu.memory_space<vmem>>, %arg3: memref<2x16x8xf32, #tpu.memory_space<vmem>>, %arg4: memref<1x64x8xf32, #tpu.memory_space<vmem>>) attributes {dimension_semantics = [#tpu.dimension_semantics<parallel>], iteration_bounds = array<i64: 2>, scalar_prefetch = 0 : i64, scratch_operands = 0 : i64, tpu.core_type = #tpu.core_type<tc>, window_params = [{transform_indices = @transform_0, window_bounds = array<i64: 1, 32, 16>}, {pipeline_mode = #tpu.pipeline_mode<synchronous>, transform_indices = @transform_1, window_bounds = array<i64: 2, 64, 32>}, {pipeline_mode = #tpu.pipeline_mode<synchronous>, transform_indices = @transform_2, window_bounds = array<i64: 2, 16, 8>}, {transform_indices = @transform_3, window_bounds = array<i64: 1, 64, 8>}]} {
    %c0 = arith.constant 0 : index
    %c0_0 = arith.constant 0 : index
    %c0_1 = arith.constant 0 : index
    %0 = vector.load %arg1[%c0, %c0_0, %c0_1] : memref<1x32x16xf32, #tpu.memory_space<vmem>>, vector<1x32x16xf32>
    %1 = vector.shape_cast %0 : vector<1x32x16xf32> to vector<32x16xf32>
    %c0_2 = arith.constant 0 : index
    %c0_3 = arith.constant 0 : index
    %c0_4 = arith.constant 0 : index
    %2 = vector.load %arg3[%c0_2, %c0_3, %c0_4] : memref<2x16x8xf32, #tpu.memory_space<vmem>>, vector<1x16x8xf32>
    %3 = vector.shape_cast %2 : vector<1x16x8xf32> to vector<16x8xf32>
    %cst = arith.constant dense<0.000000e+00> : vector<32x8xf32>
    %4 = tpu.matmul %1, %3, %cst {dimension_numbers = #tpu.dot_dimension_numbers<[1], [0], [0], [1], [0, 0, 1, 1], [], []>} : vector<32x16xf32>, vector<16x8xf32>, vector<32x8xf32> -> vector<32x8xf32>
    %c0_5 = arith.constant 0 : index
    %c0_6 = arith.constant 0 : index
    %c0_7 = arith.constant 0 : index
    %5 = vector.load %arg2[%c0_5, %c0_6, %c0_7] : memref<2x64x32xf32, #tpu.memory_space<vmem>>, vector<1x64x32xf32>
    %6 = vector.shape_cast %5 : vector<1x64x32xf32> to vector<64x32xf32>
    %cst_8 = arith.constant dense<0.000000e+00> : vector<64x8xf32>
    %7 = tpu.matmul %6, %4, %cst_8 {dimension_numbers = #tpu.dot_dimension_numbers<[1], [0], [0], [1], [0, 0, 1, 1], [], []>} : vector<64x32xf32>, vector<32x8xf32>, vector<64x8xf32> -> vector<64x8xf32>
    %c1 = arith.constant 1 : index
    %c0_9 = arith.constant 0 : index
    %c0_10 = arith.constant 0 : index
    %8 = vector.load %arg3[%c1, %c0_9, %c0_10] : memref<2x16x8xf32, #tpu.memory_space<vmem>>, vector<1x16x8xf32>
    %9 = vector.shape_cast %8 : vector<1x16x8xf32> to vector<16x8xf32>
    %cst_11 = arith.constant dense<0.000000e+00> : vector<32x8xf32>
    %10 = tpu.matmul %1, %9, %cst_11 {dimension_numbers = #tpu.dot_dimension_numbers<[1], [0], [0], [1], [0, 0, 1, 1], [], []>} : vector<32x16xf32>, vector<16x8xf32>, vector<32x8xf32> -> vector<32x8xf32>
    %c1_12 = arith.constant 1 : index
    %c0_13 = arith.constant 0 : index
    %c0_14 = arith.constant 0 : index
    %11 = vector.load %arg2[%c1_12, %c0_13, %c0_14] : memref<2x64x32xf32, #tpu.memory_space<vmem>>, vector<1x64x32xf32>
    %12 = vector.shape_cast %11 : vector<1x64x32xf32> to vector<64x32xf32>
    %cst_15 = arith.constant dense<0.000000e+00> : vector<64x8xf32>
    %13 = tpu.matmul %12, %10, %cst_15 {dimension_numbers = #tpu.dot_dimension_numbers<[1], [0], [0], [1], [0, 0, 1, 1], [], []>} : vector<64x32xf32>, vector<32x8xf32>, vector<64x8xf32> -> vector<64x8xf32>
    %14 = arith.addf %7, %13 : vector<64x8xf32>
    %c0_16 = arith.constant 0 : index
    %c0_17 = arith.constant 0 : index
    %c0_18 = arith.constant 0 : index
    %15 = vector.load %arg4[%c0_16, %c0_17, %c0_18] : memref<1x64x8xf32, #tpu.memory_space<vmem>>, vector<1x64x8xf32>
    %16 = vector.shape_cast %15 : vector<1x64x8xf32> to vector<64x8xf32>
    %17 = vector.shape_cast %14 : vector<64x8xf32> to vector<1x64x8xf32>
    tpu.vector_store %arg4[%c0_16, %c0_17, %c0_18], %17 {strides = array<i32>} : memref<1x64x8xf32, #tpu.memory_space<vmem>>, vector<1x64x8xf32>,
    return
  }
  func.func @transform_0(%arg0: i32) -> (i32, i32, i32) {
    %c0_i32 = arith.constant 0 : i32
    %c0_i32_0 = arith.constant 0 : i32
    %c0_i32_1 = arith.constant 0 : i32
    return %arg0, %c0_i32, %c0_i32_0 : i32, i32, i32
  }
  func.func @transform_1(%arg0: i32) -> (i32, i32, i32) {
    %c0_i32 = arith.constant 0 : i32
    %c0_i32_0 = arith.constant 0 : i32
    %c0_i32_1 = arith.constant 0 : i32
    %c0_i32_2 = arith.constant 0 : i32
    return %c0_i32, %c0_i32_0, %c0_i32_1 : i32, i32, i32
  }
  func.func @transform_2(%arg0: i32) -> (i32, i32, i32) {
    %c0_i32 = arith.constant 0 : i32
    %c0_i32_0 = arith.constant 0 : i32
    %c0_i32_1 = arith.constant 0 : i32
    %c0_i32_2 = arith.constant 0 : i32
    return %c0_i32, %c0_i32_0, %c0_i32_1 : i32, i32, i32
  }
  func.func @transform_3(%arg0: i32) -> (i32, i32, i32) {
    %c0_i32 = arith.constant 0 : i32
    %c0_i32_0 = arith.constant 0 : i32
    %c0_i32_1 = arith.constant 0 : i32
    return %arg0, %c0_i32, %c0_i32_0 : i32, i32, i32
  }
}

</mosaic_0001>

<llo_original>
// kernel: squeeze_layer_forward.1
$region0: #{squeeze_layer_forward.1}
  #allocation0 [shape = 'u32[]', space=smem, size = 0x4, offset = 0x4, fixed_abs, tag = 'smem constant byte address 0x4 - core index']
  #allocation1 [shape = 'u32[144,128]{1,0:T(1,128)}', space=vmem, size = 0x12000, scoped, tag = 'internal scratch']
  %s0 = inlined_call_operand.hbm [shape: f32[2,32,16], index: 0, kind: input, shape index: {}]
  %s1 = inlined_call_operand.hbm [shape: f32[2,64,32], index: 1, kind: input, shape index: {}]
  %s2 = inlined_call_operand.hbm [shape: f32[2,16,8], index: 2, kind: input, shape index: {}]
  %s3 = inlined_call_operand.vmem [shape: f32[2,64,8], index: 3, kind: output, shape index: {}]
  %s4 = sld [smem:[#allocation0]]
  $region57: #{squeeze_layer_forward.1} parent=0
    _
  %s6 = ssub.s32 1, %s4
  %s7 = scalar_select 0, %s6, %s4
  $region1: #{squeeze_layer_forward.1} parent=0
    #allocation2 [shape = 'u8[32768]{0}', space=vmem, size = 0x8000, scoped, tag = 'input window, operand 0']
    #allocation3 [shape = 's32[2]{0}', space=sflag, size = 0x8, scoped, tag = 'scoped memory for squeeze_layer_forward.1']
    #allocation4 [shape = 'u8[65536]{0}', space=vmem, size = 0x10000, scoped, tag = 'input window, operand 1, single buffered']
    #allocation5 [shape = 's32[1]{0}', space=sflag, size = 0x4, scoped, tag = 'scoped memory for squeeze_layer_forward.1']
    #allocation6 [shape = 'u8[16384]{0}', space=vmem, size = 0x4000, scoped, tag = 'input window, operand 2, single buffered']
    %8 = vsyncpa [#allocation3], 0
    %s9 = scalar_lea.sflag [#allocation3], 1
    %10 = vsyncpa %s9, 0
    %11 = vsyncpa [#allocation5], 0
    loop: start=0, step=1, limit=4
    $region2: #{squeeze_layer_forward.1} parent=1 // loop_pre_header
      _
    $region3: #{squeeze_layer_forward.1} parent=1 // loop_header
      %s13 = sphi 0, %s17
      %p14 = scmp.ge.s32.totalorder %s13, 4
      %s23 = sphi 0, %s25
      %s26 = sphi 0, %s23
      %s27 = sphi 0, %s26
      %s43 = sphi 0, %s27
      %s47 = sphi 0, %s47
      %s49 = sphi 0, %s47
      %s50 = sphi 0, %s49
      %s64 = sphi 0, %s50
      %s68 = sphi 0, %s68
      %s70 = sphi 0, %s68
      %s71 = sphi 0, %s70
      %s85 = sphi 0, %s71
      %s91 = sphi 0, %s93
      %s94 = sphi 0, %s91
      %s95 = sphi 0, %s94
      %s111 = sphi 0, %s95
    $region4: #{squeeze_layer_forward.1} parent=1 // loop_header_branch
      %16 = sbr.rel (%p14) target = $region8
    $region5: #{squeeze_layer_forward.1} parent=1 // loop_body
      %s18 = ssub.s32 %s13, 1
      %s19 = ssub.s32 %s13, 2
      %s20 = sadd.s32 %s13, 1
      %s21 = ssub.s32 %s13, %s20
      %p22 = scmp.eq.s32.totalorder %s21, 0
      %s24 = sadd.s32 %s23, 1
      %s25 = scalar_select %p22, %s23, %s24
      %p28 = pneg %p22
      %p29 = scmp.eq.s32.totalorder %s13, 1
      %p30 = por %p28, %p29
      %p31 = scmp.ne.s32.totalorder %s23, %s26
      %p32 = scmp.eq.s32.totalorder %s13, 0
      %p33 = por %p31, %p32
      %p34 = scmp.ne.s32.totalorder %s23, %s26
      %p35 = scmp.eq.s32.totalorder %s18, 1
      %p36 = por %p34, %p35
      %p37 = scmp.ne.s32.totalorder %s26, %s27
      %p38 = scmp.eq.s32.totalorder %s18, 0
      %p39 = por %p37, %p38
      %p40 = scmp.ne.s32.totalorder %s26, %s27
      %p41 = scmp.eq.s32.totalorder %s19, 1
      %p42 = por %p40, %p41
      %p44 = scmp.ne.s32.totalorder %s27, %s43
      %p45 = scmp.eq.s32.totalorder %s19, 0
      %p46 = por %p44, %p45
      %s48 = sadd.s32 %s47, 1
      %p51 = scmp.eq.s32.totalorder %s13, 1
      %p52 = scmp.ne.s32.totalorder %s47, %s49
      %p53 = scmp.eq.s32.totalorder %s13, 0
      %p54 = por %p52, %p53
      %p55 = scmp.ne.s32.totalorder %s47, %s49
      %p56 = scmp.eq.s32.totalorder %s18, 1
      %p57 = por %p55, %p56
      %p58 = scmp.ne.s32.totalorder %s49, %s50
      %p59 = scmp.eq.s32.totalorder %s18, 0
      %p60 = por %p58, %p59
      %p61 = scmp.ne.s32.totalorder %s49, %s50
      %p62 = scmp.eq.s32.totalorder %s19, 1
      %p63 = por %p61, %p62
      %p65 = scmp.ne.s32.totalorder %s50, %s64
      %p66 = scmp.eq.s32.totalorder %s19, 0
      %p67 = por %p65, %p66
      %s69 = sadd.s32 %s68, 1
      %p72 = scmp.eq.s32.totalorder %s13, 1
      %p73 = scmp.ne.s32.totalorder %s68, %s70
      %p74 = scmp.eq.s32.totalorder %s13, 0
      %p75 = por %p73, %p74
      %p76 = scmp.ne.s32.totalorder %s68, %s70
      %p77 = scmp.eq.s32.totalorder %s18, 1
      %p78 = por %p76, %p77
      %p79 = scmp.ne.s32.totalorder %s70, %s71
      %p80 = scmp.eq.s32.totalorder %s18, 0
      %p81 = por %p79, %p80
      %p82 = scmp.ne.s32.totalorder %s70, %s71
      %p83 = scmp.eq.s32.totalorder %s19, 1
      %p84 = por %p82, %p83
      %p86 = scmp.ne.s32.totalorder %s71, %s85
      %p87 = scmp.eq.s32.totalorder %s19, 0
      %p88 = por %p86, %p87
      %s89 = ssub.s32 %s13, %s20
      %p90 = scmp.eq.s32.totalorder %s89, 0
      %s92 = sadd.s32 %s91, 1
      %s93 = scalar_select %p90, %s91, %s92
      %p96 = pneg %p90
      %p97 = scmp.eq.s32.totalorder %s13, 1
      %p98 = por %p96, %p97
      %p99 = scmp.ne.s32.totalorder %s91, %s94
      %p100 = scmp.eq.s32.totalorder %s13, 0
      %p101 = por %p99, %p100
      %p102 = scmp.ne.s32.totalorder %s91, %s94
      %p103 = scmp.eq.s32.totalorder %s18, 1
      %p104 = por %p102, %p103
      %p105 = scmp.ne.s32.totalorder %s94, %s95
      %p106 = scmp.eq.s32.totalorder %s18, 0
      %p107 = por %p105, %p106
      %p108 = scmp.ne.s32.totalorder %s94, %s95
      %p109 = scmp.eq.s32.totalorder %s19, 1
      %p110 = por %p108, %p109
      %p112 = scmp.ne.s32.totalorder %s95, %s111
      %p113 = scmp.eq.s32.totalorder %s19, 0
      %p114 = por %p112, %p113
      %p115 = scmp.le.s32.totalorder 1, %s13
      %p116 = scmp.lt.s32.totalorder %s13, 3
      %p117 = pnand %p115, %p116
      %p118 = pneg %p117
      // Predicated region
      $region9: #{squeeze_layer_forward.1} parent=5 // pred_check
        _
      $region10: #{squeeze_layer_forward.1} parent=5 // pred_check_branch
        %120 = sbr.rel (%p117) target = $region12
      $region11: #{squeeze_layer_forward.1} parent=5 // pred_region
        %s121 = ssub.s32 %s13, 1
        // Predicated region
        $region13: #{squeeze_layer_forward.1} parent=11 // pred_check
          %p122 = pneg %p60
        $region14: #{squeeze_layer_forward.1} parent=11 // pred_check_branch
          %124 = sbr.rel (%p122) target = $region16
        $region15: #{squeeze_layer_forward.1} parent=11 // pred_region
          %s126 = ssub.s32 2048, 2048
          %127 = vsyncadd [#allocation5], %s126
          %s128 = sshll.u32 [#allocation4], 4
          %s129 = int_to_ptr.vmem [resolvable:$true] %s128
          %134 = dma.hbm_to_vmem [thread:$0]  %s1, 2048, %s129, [#allocation5], 128, 128, 8
        $region16: #{squeeze_layer_forward.1} parent=11 // pred_fallthru
          _
        // Predicated region
        $region17: #{squeeze_layer_forward.1} parent=11 // pred_check
          %p135 = pneg %p81
        $region18: #{squeeze_layer_forward.1} parent=11 // pred_check_branch
          %137 = sbr.rel (%p135) target = $region20
        $region19: #{squeeze_layer_forward.1} parent=11 // pred_region
          %s139 = ssub.s32 512, 512
          %140 = vsyncadd [#allocation5], %s139
          %s141 = sshll.u32 [#allocation6], 4
          %s142 = int_to_ptr.vmem [resolvable:$true] %s141
          %147 = dma.hbm_to_vmem [thread:$0]  %s2, 512, %s142, [#allocation5], 128, 128, 8
        $region20: #{squeeze_layer_forward.1} parent=11 // pred_fallthru
          _
      $region12: #{squeeze_layer_forward.1} parent=5 // pred_fallthru
        _
      %p148 = scmp.lt.s32.totalorder %s13, 2
      // Predicated region
      $region21: #{squeeze_layer_forward.1} parent=5 // pred_check
        %p149 = pneg %p148
      $region22: #{squeeze_layer_forward.1} parent=5 // pred_check_branch
        %151 = sbr.rel (%p149) target = $region24
      $region23: #{squeeze_layer_forward.1} parent=5 // pred_region
        // Predicated region
        $region25: #{squeeze_layer_forward.1} parent=23 // pred_check
          %p152 = pneg %p33
        $region26: #{squeeze_layer_forward.1} parent=23 // pred_check_branch
          %154 = sbr.rel (%p152) target = $region28
        $region27: #{squeeze_layer_forward.1} parent=23 // pred_region
          %s155 = sand.u32 %s23, 1
          %s156 = scalar_lea.sflag [#allocation3], %s155
          %s157 = sand.u32 %s23, 1
          %s158 = smul.addr %s157, 32
          %s159 = scalar_lea.vmem [#allocation2], %s158
          %s161 = ssub.s32 512, 512
          %162 = vsyncadd %s156, %s161
          %s163 = smul.addr %s13, 4
          %s164 = smul.addr %s163, 128
          %s165 = scalar_lea.hbm %s0, %s164
          %s166 = sshll.u32 %s159, 4
          %s167 = int_to_ptr.vmem [resolvable:$true] %s166
          %172 = dma.hbm_to_vmem [thread:$0]  %s165, 512, %s167, %s156, 128, 128, 8
        $region28: #{squeeze_layer_forward.1} parent=23 // pred_fallthru
          _
      $region24: #{squeeze_layer_forward.1} parent=5 // pred_fallthru
        _
      %p173 = scmp.le.s32.totalorder 1, %s13
      %p174 = scmp.lt.s32.totalorder %s13, 3
      %p175 = pnand %p173, %p174
      %p176 = pneg %p175
      // Predicated region
      $region29: #{squeeze_layer_forward.1} parent=5 // pred_check
        _
      $region30: #{squeeze_layer_forward.1} parent=5 // pred_check_branch
        %178 = sbr.rel (%p175) target = $region32
      $region31: #{squeeze_layer_forward.1} parent=5 // pred_region
        %s179 = ssub.s32 %s13, 1
        %s180 = sand.u32 %s26, 1
        %s181 = scalar_lea.sflag [#allocation3], %s180
        %s182 = sand.u32 %s26, 1
        %s183 = smul.addr %s182, 32
        %s184 = scalar_lea.vmem [#allocation2], %s183
        // Predicated region
        $region33: #{squeeze_layer_forward.1} parent=31 // pred_check
          %p185 = pneg %p39
        $region34: #{squeeze_layer_forward.1} parent=31 // pred_check_branch
          %187 = sbr.rel (%p185) target = $region36
        $region35: #{squeeze_layer_forward.1} parent=31 // pred_region
          %188 = dma.done %s181, 512
        $region36: #{squeeze_layer_forward.1} parent=31 // pred_fallthru
          _
        // Predicated region
        $region37: #{squeeze_layer_forward.1} parent=31 // pred_check
          %p189 = pneg %p60
        $region38: #{squeeze_layer_forward.1} parent=31 // pred_check_branch
          %191 = sbr.rel (%p189) target = $region40
        $region39: #{squeeze_layer_forward.1} parent=31 // pred_region
          %192 = dma.done [#allocation5], 2048
        $region40: #{squeeze_layer_forward.1} parent=31 // pred_fallthru
          _
        // Predicated region
        $region41: #{squeeze_layer_forward.1} parent=31 // pred_check
          %p193 = pneg %p81
        $region42: #{squeeze_layer_forward.1} parent=31 // pred_check_branch
          %195 = sbr.rel (%p193) target = $region44
        $region43: #{squeeze_layer_forward.1} parent=31 // pred_region
          %196 = dma.done [#allocation5], 512
        $region44: #{squeeze_layer_forward.1} parent=31 // pred_fallthru
          _
        %s197 = sand.u32 %s26, 1
        %s198 = scalar_lea.sflag [#allocation3], %s197
        %s199 = sand.u32 %s26, 1
        %s200 = smul.addr %s199, 32
        %s201 = scalar_lea.vmem [#allocation2], %s200
        %p202 = pneg %p39
        %p203 = pneg %p36
        %p204 = pneg %p60
        %p205 = pneg %p57
        %p206 = pneg %p81
        %p207 = pneg %p78
        %p208 = pneg %p107
        %p209 = pneg %p104
        %p210 = scmp.lt.s32.totalorder %s18, 1
        %s211 = scalar_select %p210, %s18, 1
        %s212 = smul.addr %s211, 8
        %s213 = smul.addr %s212, 8
        %s214 = scalar_lea.vmem %s3, %s213
        %p215 = scmp.lt.s32.totalorder %s18, 1
        %s216 = scalar_select %p215, %s18, 1
        %s217 = smul.addr %s216, 8
        %s218 = smul.addr %s217, 8
        %s219 = scalar_lea.vmem %s3, %s218
        %v220 = vld [vmem:[%s184] sm:$0xff]
        %v221 = vld [vmem:[%s184 + $0x8] sm:$0xff]
        %v222 = vld [vmem:[%s184 + $0x10] sm:$0xff]
        %v223 = vld [vmem:[%s184 + $0x18] sm:$0xff]
        %v224 = vld [vmem:[#allocation6] sm:$0xff]
        %v225 = vld [vmem:[#allocation6 + $0x8] sm:$0xff]
        %vm226 = vcmask 130048
        %v228 = vsel %vm226, %v220, 0
        %v231 = vsel %vm226, %v221, 0
        %v234 = vsel %vm226, %v222, 0
        %v237 = vsel %vm226, %v223, 0
        %239 = vmatprep.subr.mxu0 0.0
        %240 = vmatpush1.msra.mxu0 %v224
        %241 = vmatprep.subr.mxu0 0.0
        %242 = vmatpush1.msra.mxu0 %v225
        %243 = vmatprep.subr.mxu0 0.0
        %244 = vmatpush1.msra.mxu0 0.0
        %245 = vmatprep.subr.mxu0 0.0
        %246 = vmatpush1.msra.mxu0 0.0
        %247 = vmatprep.subr.mxu0 0.0
        %248 = vmatpush1.msra.mxu0 0.0
        %249 = vmatprep.subr.mxu0 0.0
        %250 = vmatpush1.msra.mxu0 0.0
        %251 = vmatprep.subr.mxu0 0.0
        %252 = vmatpush1.msra.mxu0 0.0
        %253 = vmatprep.subr.mxu0 0.0
        %254 = vmatpush1.msra.mxu0 0.0
        %255 = vmatprep.subr.mxu0 0.0
        %256 = vmatpush1.msra.mxu0 0.0
        %257 = vmatprep.subr.mxu0 0.0
        %258 = vmatpush1.msra.mxu0 0.0
        %259 = vmatprep.subr.mxu0 0.0
        %260 = vmatpush1.msra.mxu0 0.0
        %261 = vmatprep.subr.mxu0 0.0
        %262 = vmatpush1.msra.mxu0 0.0
        %263 = vmatprep.subr.mxu0 0.0
        %264 = vmatpush1.msra.mxu0 0.0
        %265 = vmatprep.subr.mxu0 0.0
        %266 = vmatpush1.msra.mxu0 0.0
        %267 = vmatprep.subr.mxu0 0.0
        %268 = vmatpush1.msra.mxu0 0.0
        %269 = vmatprep.subr.mxu0 0.0
        %270 = vmatpush1.msra.mxu0 0.0
        %271 = vmatprep.subr.mxu0 0.0
        %272 = vmatpush1.msra.mxu0 0.0
        %273 = vmatprep.subr.mxu0 0.0
        %274 = vmatpush1.msra.mxu0 0.0
        %275 = vmatprep.subr.mxu0 0.0
        %276 = vmatpush1.msra.mxu0 0.0
        %277 = vmatprep.subr.mxu0 0.0
        %278 = vmatpush1.msra.mxu0 0.0
        %279 = vmatprep.subr.mxu0 0.0
        %280 = vmatpush1.msra.mxu0 0.0
        %281 = vmatprep.subr.mxu0 0.0
        %282 = vmatpush1.msra.mxu0 0.0
        %283 = vmatprep.subr.mxu0 0.0
        %284 = vmatpush1.msra.mxu0 0.0
        %285 = vmatprep.subr.mxu0 0.0
        %286 = vmatpush1.msra.mxu0 0.0
        %287 = vmatprep.subr.mxu0 0.0
        %288 = vmatpush1.msra.mxu0 0.0
        %289 = vmatprep.subr.mxu0 0.0
        %290 = vmatpush1.msra.mxu0 0.0
        %291 = vmatprep.subr.mxu0 0.0
        %292 = vmatpush1.msra.mxu0 0.0
        %293 = vmatprep.subr.mxu0 0.0
        %294 = vmatpush1.msra.mxu0 0.0
        %295 = vmatprep.subr.mxu0 0.0
        %296 = vmatpush1.msra.mxu0 0.0
        %297 = vmatprep.subr.mxu0 0.0
        %298 = vmatpush1.msra.mxu0 0.0
        %299 = vmatprep.subr.mxu0 0.0
        %300 = vmatpush1.msra.mxu0 0.0
        %301 = vmatprep.subr.mxu0 0.0
        %302 = vmatpush1.msra.mxu0 0.0
        %303 = vmatprep.mubr.f32.mxu0 0.0
        %304 = vmatmul.mubr.f32.gmra.mrb[0].mxu0 %v228
        %v305 = vpop.f32.mrb[0].mxu0
        %v306 = vadd.f32 0.0, %v305
        %v307 = vpop.f32.mrb[0].mxu0
        %308 = vmatprep.mubr.f32.mxu0 0.0
        %309 = vmatmul.mubr.f32.gmra.mrb[0].mxu0 %v231
        %v310 = vpop.f32.mrb[0].mxu0
        %v311 = vadd.f32 0.0, %v310
        %v312 = vpop.f32.mrb[0].mxu0
        %313 = vmatprep.mubr.f32.mxu0 0.0
        %314 = vmatmul.mubr.f32.gmra.mrb[0].mxu0 %v234
        %v315 = vpop.f32.mrb[0].mxu0
        %v316 = vadd.f32 0.0, %v315
        %v317 = vpop.f32.mrb[0].mxu0
        %318 = vmatprep.mubr.f32.mxu0 0.0
        %319 = vmatmul.mubr.f32.gmra.mrb[0].mxu0 %v237
        %v320 = vpop.f32.mrb[0].mxu0
        %v321 = vadd.f32 0.0, %v320
        %v322 = vpop.f32.mrb[0].mxu0
        %323 = vdwg.mxu0
        %v324 = vld [vmem:[#allocation4] sm:$0xff]
        %v325 = vld [vmem:[#allocation4 + $0x8] sm:$0xff]
        %v326 = vld [vmem:[#allocation4 + $0x10] sm:$0xff]
        %v327 = vld [vmem:[#allocation4 + $0x18] sm:$0xff]
        %v328 = vld [vmem:[#allocation4 + $0x20] sm:$0xff]
        %v329 = vld [vmem:[#allocation4 + $0x28] sm:$0xff]
        %v330 = vld [vmem:[#allocation4 + $0x30] sm:$0xff]
        %v331 = vld [vmem:[#allocation4 + $0x38] sm:$0xff]
        %s332 = scalar_lea.vmem [#allocation6], 16
        %v333 = vld [vmem:[%s332] sm:$0xff]
        %v334 = vld [vmem:[%s332 + $0x8] sm:$0xff]
        %335 = vmatprep.subr.mxu0 0.0
        %336 = vmatpush1.msra.mxu0 %v333
        %337 = vmatprep.subr.mxu0 0.0
        %338 = vmatpush1.msra.mxu0 %v334
        %339 = vmatprep.subr.mxu0 0.0
        %340 = vmatpush1.msra.mxu0 0.0
        %341 = vmatprep.subr.mxu0 0.0
        %342 = vmatpush1.msra.mxu0 0.0
        %343 = vmatprep.subr.mxu0 0.0
        %344 = vmatpush1.msra.mxu0 0.0
        %345 = vmatprep.subr.mxu0 0.0
        %346 = vmatpush1.msra.mxu0 0.0
        %347 = vmatprep.subr.mxu0 0.0
        %348 = vmatpush1.msra.mxu0 0.0
        %349 = vmatprep.subr.mxu0 0.0
        %350 = vmatpush1.msra.mxu0 0.0
        %351 = vmatprep.subr.mxu0 0.0
        %352 = vmatpush1.msra.mxu0 0.0
        %353 = vmatprep.subr.mxu0 0.0
        %354 = vmatpush1.msra.mxu0 0.0
        %355 = vmatprep.subr.mxu0 0.0
        %356 = vmatpush1.msra.mxu0 0.0
        %357 = vmatprep.subr.mxu0 0.0
        %358 = vmatpush1.msra.mxu0 0.0
        %359 = vmatprep.subr.mxu0 0.0
        %360 = vmatpush1.msra.mxu0 0.0
        %361 = vmatprep.subr.mxu0 0.0
        %362 = vmatpush1.msra.mxu0 0.0
        %363 = vmatprep.subr.mxu0 0.0
        %364 = vmatpush1.msra.mxu0 0.0
        %365 = vmatprep.subr.mxu0 0.0
        %366 = vmatpush1.msra.mxu0 0.0
        %367 = vmatprep.subr.mxu0 0.0
        %368 = vmatpush1.msra.mxu0 0.0
        %369 = vmatprep.subr.mxu0 0.0
        %370 = vmatpush1.msra.mxu0 0.0
        %371 = vmatprep.subr.mxu0 0.0
        %372 = vmatpush1.msra.mxu0 0.0
        %373 = vmatprep.subr.mxu0 0.0
        %374 = vmatpush1.msra.mxu0 0.0
        %375 = vmatprep.subr.mxu0 0.0
        %376 = vmatpush1.msra.mxu0 0.0
        %377 = vmatprep.subr.mxu0 0.0
        %378 = vmatpush1.msra.mxu0 0.0
        %379 = vmatprep.subr.mxu0 0.0
        %380 = vmatpush1.msra.mxu0 0.0
        %381 = vmatprep.subr.mxu0 0.0
        %382 = vmatpush1.msra.mxu0 0.0
        %383 = vmatprep.subr.mxu0 0.0
        %384 = vmatpush1.msra.mxu0 0.0
        %385 = vmatprep.subr.mxu0 0.0
        %386 = vmatpush1.msra.mxu0 0.0
        %387 = vmatprep.subr.mxu0 0.0
        %388 = vmatpush1.msra.mxu0 0.0
        %389 = vmatprep.subr.mxu0 0.0
        %390 = vmatpush1.msra.mxu0 0.0
        %391 = vmatprep.subr.mxu0 0.0
        %392 = vmatpush1.msra.mxu0 0.0
        %393 = vmatprep.subr.mxu0 0.0
        %394 = vmatpush1.msra.mxu0 0.0
        %395 = vmatprep.subr.mxu0 0.0
        %396 = vmatpush1.msra.mxu0 0.0
        %397 = vmatprep.subr.mxu0 0.0
        %398 = vmatpush1.msra.mxu0 0.0
        %399 = vmatprep.mubr.f32.mxu0 0.0
        %400 = vmatmul.mubr.f32.gmra.mrb[0].mxu0 %v228
        %v401 = vpop.f32.mrb[0].mxu0
        %v402 = vadd.f32 0.0, %v401
        %v403 = vpop.f32.mrb[0].mxu0
        %404 = vmatprep.mubr.f32.mxu0 0.0
        %405 = vmatmul.mubr.f32.gmra.mrb[0].mxu0 %v231
        %v406 = vpop.f32.mrb[0].mxu0
        %v407 = vadd.f32 0.0, %v406
        %v408 = vpop.f32.mrb[0].mxu0
        %409 = vmatprep.mubr.f32.mxu0 0.0
        %410 = vmatmul.mubr.f32.gmra.mrb[0].mxu0 %v234
        %v411 = vpop.f32.mrb[0].mxu0
        %v412 = vadd.f32 0.0, %v411
        %v413 = vpop.f32.mrb[0].mxu0
        %414 = vmatprep.mubr.f32.mxu0 0.0
        %415 = vmatmul.mubr.f32.gmra.mrb[0].mxu0 %v237
        %v416 = vpop.f32.mrb[0].mxu0
        %v417 = vadd.f32 0.0, %v416
        %v418 = vpop.f32.mrb[0].mxu0
        %419 = vdwg.mxu0
        %s420 = scalar_lea.vmem [#allocation4], 64
        %v421 = vld [vmem:[%s420] sm:$0xff]
        %v422 = vld [vmem:[%s420 + $0x8] sm:$0xff]
        %v423 = vld [vmem:[%s420 + $0x10] sm:$0xff]
        %v424 = vld [vmem:[%s420 + $0x18] sm:$0xff]
        %v425 = vld [vmem:[%s420 + $0x20] sm:$0xff]
        %v426 = vld [vmem:[%s420 + $0x28] sm:$0xff]
        %v427 = vld [vmem:[%s420 + $0x30] sm:$0xff]
        %v428 = vld [vmem:[%s420 + $0x38] sm:$0xff]
        %vm429 = vcmask 261120
        %v431 = vsel %vm429, %v421, 0
        %v434 = vsel %vm429, %v422, 0
        %v437 = vsel %vm429, %v423, 0
        %v440 = vsel %vm429, %v424, 0
        %v443 = vsel %vm429, %v425, 0
        %v446 = vsel %vm429, %v426, 0
        %v449 = vsel %vm429, %v427, 0
        %v452 = vsel %vm429, %v428, 0
        %454 = vmatprep.subr.mxu0 0.0
        %455 = vmatpush1.msra.mxu0 %v402
        %456 = vmatprep.subr.mxu0 0.0
        %457 = vmatpush1.msra.mxu0 %v407
        %458 = vmatprep.subr.mxu0 0.0
        %459 = vmatpush1.msra.mxu0 %v412
        %460 = vmatprep.subr.mxu0 0.0
        %461 = vmatpush1.msra.mxu0 %v417
        %462 = vmatprep.subr.mxu0 0.0
        %463 = vmatpush1.msra.mxu0 0.0
        %464 = vmatprep.subr.mxu0 0.0
        %465 = vmatpush1.msra.mxu0 0.0
        %466 = vmatprep.subr.mxu0 0.0
        %467 = vmatpush1.msra.mxu0 0.0
        %468 = vmatprep.subr.mxu0 0.0
        %469 = vmatpush1.msra.mxu0 0.0
        %470 = vmatprep.subr.mxu0 0.0
        %471 = vmatpush1.msra.mxu0 0.0
        %472 = vmatprep.subr.mxu0 0.0
        %473 = vmatpush1.msra.mxu0 0.0
        %474 = vmatprep.subr.mxu0 0.0
        %475 = vmatpush1.msra.mxu0 0.0
        %476 = vmatprep.subr.mxu0 0.0
        %477 = vmatpush1.msra.mxu0 0.0
        %478 = vmatprep.subr.mxu0 0.0
        %479 = vmatpush1.msra.mxu0 0.0
        %480 = vmatprep.subr.mxu0 0.0
        %481 = vmatpush1.msra.mxu0 0.0
        %482 = vmatprep.subr.mxu0 0.0
        %483 = vmatpush1.msra.mxu0 0.0
        %484 = vmatprep.subr.mxu0 0.0
        %485 = vmatpush1.msra.mxu0 0.0
        %486 = vmatprep.subr.mxu0 0.0
        %487 = vmatpush1.msra.mxu0 0.0
        %488 = vmatprep.subr.mxu0 0.0
        %489 = vmatpush1.msra.mxu0 0.0
        %490 = vmatprep.subr.mxu0 0.0
        %491 = vmatpush1.msra.mxu0 0.0
        %492 = vmatprep.subr.mxu0 0.0
        %493 = vmatpush1.msra.mxu0 0.0
        %494 = vmatprep.subr.mxu0 0.0
        %495 = vmatpush1.msra.mxu0 0.0
        %496 = vmatprep.subr.mxu0 0.0
        %497 = vmatpush1.msra.mxu0 0.0
        %498 = vmatprep.subr.mxu0 0.0
        %499 = vmatpush1.msra.mxu0 0.0
        %500 = vmatprep.subr.mxu0 0.0
        %501 = vmatpush1.msra.mxu0 0.0
        %502 = vmatprep.subr.mxu0 0.0
        %503 = vmatpush1.msra.mxu0 0.0
        %504 = vmatprep.subr.mxu0 0.0
        %505 = vmatpush1.msra.mxu0 0.0
        %506 = vmatprep.subr.mxu0 0.0
        %507 = vmatpush1.msra.mxu0 0.0
        %508 = vmatprep.subr.mxu0 0.0
        %509 = vmatpush1.msra.mxu0 0.0
        %510 = vmatprep.subr.mxu0 0.0
        %511 = vmatpush1.msra.mxu0 0.0
        %512 = vmatprep.subr.mxu0 0.0
        %513 = vmatpush1.msra.mxu0 0.0
        %514 = vmatprep.subr.mxu0 0.0
        %515 = vmatpush1.msra.mxu0 0.0
        %516 = vmatprep.subr.mxu0 0.0
        %517 = vmatpush1.msra.mxu0 0.0
        %518 = vmatprep.mubr.f32.mxu0 0.0
        %519 = vmatmul.mubr.f32.gmra.mrb[0].mxu0 %v431
        %v520 = vpop.f32.mrb[0].mxu0
        %v521 = vadd.f32 0.0, %v520
        %v522 = vpop.f32.mrb[0].mxu0
        %523 = vmatprep.mubr.f32.mxu0 0.0
        %524 = vmatmul.mubr.f32.gmra.mrb[0].mxu0 %v434
        %v525 = vpop.f32.mrb[0].mxu0
        %v526 = vadd.f32 0.0, %v525
        %v527 = vpop.f32.mrb[0].mxu0
        %528 = vmatprep.mubr.f32.mxu0 0.0
        %529 = vmatmul.mubr.f32.gmra.mrb[0].mxu0 %v437
        %v530 = vpop.f32.mrb[0].mxu0
        %v531 = vadd.f32 0.0, %v530
        %v532 = vpop.f32.mrb[0].mxu0
        %533 = vmatprep.mubr.f32.mxu0 0.0
        %534 = vmatmul.mubr.f32.gmra.mrb[0].mxu0 %v440
        %v535 = vpop.f32.mrb[0].mxu0
        %v536 = vadd.f32 0.0, %v535
        %v537 = vpop.f32.mrb[0].mxu0
        %538 = vmatprep.mubr.f32.mxu0 0.0
        %539 = vmatmul.mubr.f32.gmra.mrb[0].mxu0 %v443
        %v540 = vpop.f32.mrb[0].mxu0
        %v541 = vadd.f32 0.0, %v540
        %v542 = vpop.f32.mrb[0].mxu0
        %543 = vmatprep.mubr.f32.mxu0 0.0
        %544 = vmatmul.mubr.f32.gmra.mrb[0].mxu0 %v446
        %v545 = vpop.f32.mrb[0].mxu0
        %v546 = vadd.f32 0.0, %v545
        %v547 = vpop.f32.mrb[0].mxu0
        %548 = vmatprep.mubr.f32.mxu0 0.0
        %549 = vmatmul.mubr.f32.gmra.mrb[0].mxu0 %v449
        %v550 = vpop.f32.mrb[0].mxu0
        %v551 = vadd.f32 0.0, %v550
        %v552 = vpop.f32.mrb[0].mxu0
        %553 = vmatprep.mubr.f32.mxu0 0.0
        %554 = vmatmul.mubr.f32.gmra.mrb[0].mxu0 %v452
        %v555 = vpop.f32.mrb[0].mxu0
        %v556 = vadd.f32 0.0, %v555
        %v557 = vpop.f32.mrb[0].mxu0
        %558 = vdwg.mxu0
        %v560 = vsel %vm429, %v324, 0
        %v563 = vsel %vm429, %v325, 0
        %v566 = vsel %vm429, %v326, 0
        %v569 = vsel %vm429, %v327, 0
        %v572 = vsel %vm429, %v328, 0
        %v575 = vsel %vm429, %v329, 0
        %v578 = vsel %vm429, %v330, 0
        %v581 = vsel %vm429, %v331, 0
        %583 = vmatprep.subr.mxu0 0.0
        %584 = vmatpush1.msra.mxu0 %v306
        %585 = vmatprep.subr.mxu0 0.0
        %586 = vmatpush1.msra.mxu0 %v311
        %587 = vmatprep.subr.mxu0 0.0
        %588 = vmatpush1.msra.mxu0 %v316
        %589 = vmatprep.subr.mxu0 0.0
        %590 = vmatpush1.msra.mxu0 %v321
        %591 = vmatprep.subr.mxu0 0.0
        %592 = vmatpush1.msra.mxu0 0.0
        %593 = vmatprep.subr.mxu0 0.0
        %594 = vmatpush1.msra.mxu0 0.0
        %595 = vmatprep.subr.mxu0 0.0
        %596 = vmatpush1.msra.mxu0 0.0
        %597 = vmatprep.subr.mxu0 0.0
        %598 = vmatpush1.msra.mxu0 0.0
        %599 = vmatprep.subr.mxu0 0.0
        %600 = vmatpush1.msra.mxu0 0.0
        %601 = vmatprep.subr.mxu0 0.0
        %602 = vmatpush1.msra.mxu0 0.0
        %603 = vmatprep.subr.mxu0 0.0
        %604 = vmatpush1.msra.mxu0 0.0
        %605 = vmatprep.subr.mxu0 0.0
        %606 = vmatpush1.msra.mxu0 0.0
        %607 = vmatprep.subr.mxu0 0.0
        %608 = vmatpush1.msra.mxu0 0.0
        %609 = vmatprep.subr.mxu0 0.0
        %610 = vmatpush1.msra.mxu0 0.0
        %611 = vmatprep.subr.mxu0 0.0
        %612 = vmatpush1.msra.mxu0 0.0
        %613 = vmatprep.subr.mxu0 0.0
        %614 = vmatpush1.msra.mxu0 0.0
        %615 = vmatprep.subr.mxu0 0.0
        %616 = vmatpush1.msra.mxu0 0.0
        %617 = vmatprep.subr.mxu0 0.0
        %618 = vmatpush1.msra.mxu0 0.0
        %619 = vmatprep.subr.mxu0 0.0
        %620 = vmatpush1.msra.mxu0 0.0
        %621 = vmatprep.subr.mxu0 0.0
        %622 = vmatpush1.msra.mxu0 0.0
        %623 = vmatprep.subr.mxu0 0.0
        %624 = vmatpush1.msra.mxu0 0.0
        %625 = vmatprep.subr.mxu0 0.0
        %626 = vmatpush1.msra.mxu0 0.0
        %627 = vmatprep.subr.mxu0 0.0
        %628 = vmatpush1.msra.mxu0 0.0
        %629 = vmatprep.subr.mxu0 0.0
        %630 = vmatpush1.msra.mxu0 0.0
        %631 = vmatprep.subr.mxu0 0.0
        %632 = vmatpush1.msra.mxu0 0.0
        %633 = vmatprep.subr.mxu0 0.0
        %634 = vmatpush1.msra.mxu0 0.0
        %635 = vmatprep.subr.mxu0 0.0
        %636 = vmatpush1.msra.mxu0 0.0
        %637 = vmatprep.subr.mxu0 0.0
        %638 = vmatpush1.msra.mxu0 0.0
        %639 = vmatprep.subr.mxu0 0.0
        %640 = vmatpush1.msra.mxu0 0.0
        %641 = vmatprep.subr.mxu0 0.0
        %642 = vmatpush1.msra.mxu0 0.0
        %643 = vmatprep.subr.mxu0 0.0
        %644 = vmatpush1.msra.mxu0 0.0
        %645 = vmatprep.subr.mxu0 0.0
        %646 = vmatpush1.msra.mxu0 0.0
        %647 = vmatprep.mubr.f32.mxu0 0.0
        %648 = vmatmul.mubr.f32.gmra.mrb[0].mxu0 %v560
        %v649 = vpop.f32.mrb[0].mxu0
        %v650 = vadd.f32 %v521, %v649
        %v651 = vpop.f32.mrb[0].mxu0
        %652 = vmatprep.mubr.f32.mxu0 0.0
        %653 = vmatmul.mubr.f32.gmra.mrb[0].mxu0 %v563
        %v654 = vpop.f32.mrb[0].mxu0
        %v655 = vadd.f32 %v526, %v654
        %v656 = vpop.f32.mrb[0].mxu0
        %657 = vmatprep.mubr.f32.mxu0 0.0
        %658 = vmatmul.mubr.f32.gmra.mrb[0].mxu0 %v566
        %v659 = vpop.f32.mrb[0].mxu0
        %v660 = vadd.f32 %v531, %v659
        %v661 = vpop.f32.mrb[0].mxu0
        %662 = vmatprep.mubr.f32.mxu0 0.0
        %663 = vmatmul.mubr.f32.gmra.mrb[0].mxu0 %v569
        %v664 = vpop.f32.mrb[0].mxu0
        %v665 = vadd.f32 %v536, %v664
        %v666 = vpop.f32.mrb[0].mxu0
        %667 = vmatprep.mubr.f32.mxu0 0.0
        %668 = vmatmul.mubr.f32.gmra.mrb[0].mxu0 %v572
        %v669 = vpop.f32.mrb[0].mxu0
        %v670 = vadd.f32 %v541, %v669
        %v671 = vpop.f32.mrb[0].mxu0
        %672 = vmatprep.mubr.f32.mxu0 0.0
        %673 = vmatmul.mubr.f32.gmra.mrb[0].mxu0 %v575
        %v674 = vpop.f32.mrb[0].mxu0
        %v675 = vadd.f32 %v546, %v674
        %v676 = vpop.f32.mrb[0].mxu0
        %677 = vmatprep.mubr.f32.mxu0 0.0
        %678 = vmatmul.mubr.f32.gmra.mrb[0].mxu0 %v578
        %v679 = vpop.f32.mrb[0].mxu0
        %v680 = vadd.f32 %v551, %v679
        %v681 = vpop.f32.mrb[0].mxu0
        %682 = vmatprep.mubr.f32.mxu0 0.0
        %683 = vmatmul.mubr.f32.gmra.mrb[0].mxu0 %v581
        %v684 = vpop.f32.mrb[0].mxu0
        %v685 = vadd.f32 %v556, %v684
        %v686 = vpop.f32.mrb[0].mxu0
        %687 = vdwg.mxu0
        %vm688 = vcmask 64512
        %689 = vst.msk [vmem:[%s219] sm:$0xff] %vm688, %v650
        %690 = vst.msk [vmem:[%s219 + $0x8] sm:$0xff] %vm688, %v655
        %691 = vst.msk [vmem:[%s219 + $0x10] sm:$0xff] %vm688, %v660
        %692 = vst.msk [vmem:[%s219 + $0x18] sm:$0xff] %vm688, %v665
        %693 = vst.msk [vmem:[%s219 + $0x20] sm:$0xff] %vm688, %v670
        %694 = vst.msk [vmem:[%s219 + $0x28] sm:$0xff] %vm688, %v675
        %695 = vst.msk [vmem:[%s219 + $0x30] sm:$0xff] %vm688, %v680
        %696 = vst.msk [vmem:[%s219 + $0x38] sm:$0xff] %vm688, %v685
        %p697 = scmp.lt.s32.totalorder %s18, 1
        %s698 = scalar_select %p697, %s18, 1
        %s699 = smul.addr %s698, 8
        %s700 = smul.addr %s699, 8
        %s701 = scalar_lea.vmem %s3, %s700
        // Predicated region
        $region45: #{squeeze_layer_forward.1} parent=31 // pred_check
          %p702 = pneg %p104
        $region46: #{squeeze_layer_forward.1} parent=31 // pred_check_branch
          %704 = sbr.rel (%p702) target = $region48
        $region47: #{squeeze_layer_forward.1} parent=31 // pred_region
          _
        $region48: #{squeeze_layer_forward.1} parent=31 // pred_fallthru
          _
      $region32: #{squeeze_layer_forward.1} parent=5 // pred_fallthru
        _
      %p705 = scmp.le.s32.totalorder 2, %s13
      // Predicated region
      $region49: #{squeeze_layer_forward.1} parent=5 // pred_check
        %p706 = pneg %p705
      $region50: #{squeeze_layer_forward.1} parent=5 // pred_check_branch
        %708 = sbr.rel (%p706) target = $region52
      $region51: #{squeeze_layer_forward.1} parent=5 // pred_region
        %s709 = ssub.s32 %s13, 2
        // Predicated region
        $region53: #{squeeze_layer_forward.1} parent=51 // pred_check
          %p710 = pneg %p110
        $region54: #{squeeze_layer_forward.1} parent=51 // pred_check_branch
          %712 = sbr.rel (%p710) target = $region56
        $region55: #{squeeze_layer_forward.1} parent=51 // pred_region
          %p713 = scmp.lt.s32.totalorder %s19, 1
          %s714 = scalar_select %p713, %s19, 1
          %s715 = smul.addr %s714, 8
          %s716 = smul.addr %s715, 8
          %s717 = scalar_lea.vmem %s3, %s716
        $region56: #{squeeze_layer_forward.1} parent=51 // pred_fallthru
          _
      $region52: #{squeeze_layer_forward.1} parent=5 // pred_fallthru
        _
    $region6: #{squeeze_layer_forward.1} parent=1 // loop_footer
      %s17 = sadd.s32 1, %s13
    $region7: #{squeeze_layer_forward.1} parent=1 // loop_footer_branch
      %12 = sbr.rel target = $region3
    $region8: #{squeeze_layer_forward.1} parent=1 // loop_exit
      _
    %718 = vsyncpa [#allocation3], 1
    %s719 = scalar_lea.sflag [#allocation3], 1
    %720 = vsyncpa %s719, 1
    %721 = vsyncpa [#allocation5], 1

</llo_original>
